<compile_context>
chip_gen: v5e
topology: v5e:2x2
jax: 0.10.0
libtpu: 0.0.40
codegen_flags: <defaults>
</compile_context>

<pallas_src>
import jax
import jax.numpy as jnp
from jax.experimental import pallas as pl
from jax.experimental.pallas import tpu as pltpu

_LANE = 128
_SUBLANE = 8


def _round_up(x, m):
    return ((x + m - 1) // m) * m


def mlp_kernel(x_ref, w1_ref, b1_ref, w2_ref, b2_ref, o_ref):
    # fc1: [TB, In] @ [In, H] + [1, H]  (f32 accumulation on the MXU)
    h = jnp.dot(x_ref[...], w1_ref[...], preferred_element_type=jnp.float32)
    # bias + ReLU in f32 on the VPU
    h = jnp.maximum(h + b1_ref[...], 0.0)
    # Dropout(p=0.2): inference-mode identity.
    # TODO(synk): training-mode dropout would use pltpu.prng_seed/prng_random_bits
    #             with a keep mask and 1/(1-p) scaling.
    # fc2: [TB, H] @ [H, C_p] + [1, C_p]  (C padded to one full 128-lane tile).
    # h is cast to the weight dtype (no-op for f32 params, bf16 MXU path otherwise).
    out = jnp.dot(h.astype(w2_ref.dtype), w2_ref[...],
                  preferred_element_type=jnp.float32)
    o_ref[...] = (out + b2_ref[...]).astype(o_ref.dtype)


def simple_mlp_forward(x, w1, b1, w2, b2, *, block_b=512, param_dtype=None):
    """x: [B, In]; w1: [In, H]; b1: [1, H]; w2: [H, C]; b2: [1, C] -> [B, C].

    param_dtype: optional storage dtype for w1/w2 (e.g. jnp.bfloat16) to halve
    weight HBM traffic; accumulation and bias/ReLU stay f32 in the kernel.
    """
    B, In = x.shape
    H = w1.shape[1]
    C = w2.shape[1]

    # Only the class dim is padded (10 -> 128) so the output store is lane-dense.
    # The contraction dim K=784 is NOT padded: full-dim blocks are legal and
    # Mosaic handles internal lane padding, avoiding an extra HBM pass over x.
    C_p = _round_up(C, _LANE)

    # Batch tile: force a multiple of 8 sublanes, cap at 1024 rows so
    # double-buffered x tiles + resident weights + f32 intermediates stay well
    # inside v5e's 16 MiB default scoped VMEM (v6e/v7x have more headroom).
    block_b = _round_up(max(min(block_b, 1024), _SUBLANE), _SUBLANE)
    B_p = _round_up(B, _SUBLANE)
    TB = min(block_b, B_p)          # single grid step for small B
    B_p = _round_up(B_p, TB)        # B padded to a whole number of tiles
    # For large B (B > block_b) the grid naturally has >= 2 "parallel" steps,
    # which lets v7x shard the batch axis across both TensorCores.

    x_p = jnp.pad(x, ((0, B_p - B), (0, 0))) if B_p != B else x
    w1_p = w1
    w2_p = jnp.pad(w2, ((0, 0), (0, C_p - C))) if C_p != C else w2
    b2_p = jnp.pad(b2, ((0, 0), (0, C_p - C))) if C_p != C else b2

    if param_dtype is not None:
        # bf16 weights: halves HBM bytes for the dominant weight loads and uses
        # the MXU's native low-precision path; biases stay f32 (added to f32 acc).
        w1_p = w1_p.astype(param_dtype)
        w2_p = w2_p.astype(param_dtype)

    grid = (B_p // TB,)

    bytes_accessed = (
        x_p.size * x_p.dtype.itemsize
        + w1_p.size * w1_p.dtype.itemsize
        + b1.size * b1.dtype.itemsize
        + w2_p.size * w2_p.dtype.itemsize
        + b2_p.size * b2_p.dtype.itemsize
        + B_p * C_p * jnp.dtype(x.dtype).itemsize
    )
    cost = pl.CostEstimate(
        flops=2 * B_p * (In * H + H * C_p),
        transcendentals=0,
        bytes_accessed=bytes_accessed,
    )

    out_p = pl.pallas_call(
        mlp_kernel,
        out_shape=jax.ShapeDtypeStruct((B_p, C_p), x.dtype),
        grid=grid,
        in_specs=[
            # x: one batch tile per grid step (pipelined); full K dim per block.
            pl.BlockSpec((TB, In), lambda i: (i, 0)),
            # Weights / biases: full arrays, resident in VMEM across all steps.
            # (If profiling shows exposed x DMA, sweep pipeline_mode=pl.Buffered(3)
            #  on the x spec and Buffered(1) here to reclaim the redundant buffer.)
            pl.BlockSpec((In, H), lambda i: (0, 0)),
            pl.BlockSpec((1, H), lambda i: (0, 0)),
            pl.BlockSpec((H, C_p), lambda i: (0, 0)),
            pl.BlockSpec((1, C_p), lambda i: (0, 0)),
        ],
        out_specs=pl.BlockSpec((TB, C_p), lambda i: (i, 0)),
        compiler_params=pltpu.CompilerParams(
            dimension_semantics=("parallel",)),
        cost_estimate=cost,
    )(x_p, w1_p, b1, w2_p, b2_p)

    # Drop batch padding and the padded (zero) class columns.
    # (For large-B consumers, prefer returning the padded [B_p, 128] buffer and
    #  fusing this slice into the next op to avoid an extra HBM copy.)
    return out_p[:B, :C]


if __name__ == "__main__":
    # Module shapes: input_size=784, hidden_size=128, num_classes=10.
    batch = 32
    input_size = 784
    hidden_size = 128
    num_classes = 10

    key = jax.random.PRNGKey(0)
    kx, kw1, kb1, kw2, kb2 = jax.random.split(key, 5)

    x = jax.random.normal(kx, (batch, input_size), dtype=jnp.float32)

    # Deterministic init mimicking nn.Linear's uniform(-1/sqrt(fan_in), 1/sqrt(fan_in)).
    bound1 = 1.0 / (input_size ** 0.5)
    w1 = jax.random.uniform(kw1, (input_size, hidden_size),
                            minval=-bound1, maxval=bound1, dtype=jnp.float32)
    b1 = jax.random.uniform(kb1, (1, hidden_size),
                            minval=-bound1, maxval=bound1, dtype=jnp.float32)
    bound2 = 1.0 / (hidden_size ** 0.5)
    w2 = jax.random.uniform(kw2, (hidden_size, num_classes),
                            minval=-bound2, maxval=bound2, dtype=jnp.float32)
    b2 = jax.random.uniform(kb2, (1, num_classes),
                            minval=-bound2, maxval=bound2, dtype=jnp.float32)

    # Default (f32 params, single grid step for this small batch).
    out = simple_mlp_forward(x, w1, b1, w2, b2)
    out = jax.block_until_ready(out)

    # Reference check in plain JAX (dropout is identity in inference mode).
    ref = jnp.maximum(x @ w1 + b1, 0.0) @ w2 + b2
    assert out.shape == (batch, num_classes)
    assert jnp.allclose(out, ref, atol=1e-4, rtol=1e-4)

    # Also exercise the multi-step pipelined grid path (TB=16 -> grid=(2,)).
    out_tiled = jax.block_until_ready(
        simple_mlp_forward(x, w1, b1, w2, b2, block_b=16))
    assert jnp.allclose(out_tiled, ref, atol=1e-4, rtol=1e-4)

    print("KERNEL_OK")
</pallas_src>

<mosaic_0001>
module attributes {stable_mosaic.version = 11 : i64} {
  func.func @mlp_kernel(%arg0: i32, %arg1: memref<32x784xf32, #tpu.memory_space<vmem>>, %arg2: memref<784x128xf32, #tpu.memory_space<vmem>>, %arg3: memref<1x128xf32, #tpu.memory_space<vmem>>, %arg4: memref<128x128xf32, #tpu.memory_space<vmem>>, %arg5: memref<1x128xf32, #tpu.memory_space<vmem>>, %arg6: memref<32x128xf32, #tpu.memory_space<vmem>>) attributes {dimension_semantics = [#tpu.dimension_semantics<parallel>], iteration_bounds = array<i64: 1>, scalar_prefetch = 0 : i64, scratch_operands = 0 : i64, tpu.core_type = #tpu.core_type<tc>, window_params = [{transform_indices = @transform_0, window_bounds = array<i64: 32, 784>}, {pipeline_mode = #tpu.pipeline_mode<synchronous>, transform_indices = @transform_1, window_bounds = array<i64: 784, 128>}, {pipeline_mode = #tpu.pipeline_mode<synchronous>, transform_indices = @transform_2, window_bounds = array<i64: 1, 128>}, {pipeline_mode = #tpu.pipeline_mode<synchronous>, transform_indices = @transform_3, window_bounds = array<i64: 128, 128>}, {pipeline_mode = #tpu.pipeline_mode<synchronous>, transform_indices = @transform_4, window_bounds = array<i64: 1, 128>}, {transform_indices = @transform_5, window_bounds = array<i64: 32, 128>}]} {
    %c0 = arith.constant 0 : index
    %c0_0 = arith.constant 0 : index
    %0 = vector.load %arg1[%c0, %c0_0] : memref<32x784xf32, #tpu.memory_space<vmem>>, vector<32x784xf32>
    %c0_1 = arith.constant 0 : index
    %c0_2 = arith.constant 0 : index
    %1 = vector.load %arg2[%c0_1, %c0_2] : memref<784x128xf32, #tpu.memory_space<vmem>>, vector<784x128xf32>
    %cst = arith.constant dense<0.000000e+00> : vector<32x128xf32>
    %2 = tpu.matmul %0, %1, %cst {dimension_numbers = #tpu.dot_dimension_numbers<[1], [0], [0], [1], [0, 0, 1, 1], [], []>} : vector<32x784xf32>, vector<784x128xf32>, vector<32x128xf32> -> vector<32x128xf32>
    %c0_3 = arith.constant 0 : index
    %c0_4 = arith.constant 0 : index
    %3 = vector.load %arg3[%c0_3, %c0_4] : memref<1x128xf32, #tpu.memory_space<vmem>>, vector<1x128xf32>
    %4 = vector.broadcast %3 : vector<1x128xf32> to vector<32x128xf32>
    %5 = arith.addf %2, %4 : vector<32x128xf32>
    %cst_5 = arith.constant 0.000000e+00 : f32
    %6 = vector.broadcast %cst_5 : f32 to vector<32x128xf32>
    %7 = arith.maximumf %5, %6 : vector<32x128xf32>
    %c0_6 = arith.constant 0 : index
    %c0_7 = arith.constant 0 : index
    %8 = vector.load %arg4[%c0_6, %c0_7] : memref<128x128xf32, #tpu.memory_space<vmem>>, vector<128x128xf32>
    %cst_8 = arith.constant dense<0.000000e+00> : vector<32x128xf32>
    %9 = tpu.matmul %7, %8, %cst_8 {dimension_numbers = #tpu.dot_dimension_numbers<[1], [0], [0], [1], [0, 0, 1, 1], [], []>} : vector<32x128xf32>, vector<128x128xf32>, vector<32x128xf32> -> vector<32x128xf32>
    %c0_9 = arith.constant 0 : index
    %c0_10 = arith.constant 0 : index
    %10 = vector.load %arg5[%c0_9, %c0_10] : memref<1x128xf32, #tpu.memory_space<vmem>>, vector<1x128xf32>
    %11 = vector.broadcast %10 : vector<1x128xf32> to vector<32x128xf32>
    %12 = arith.addf %9, %11 : vector<32x128xf32>
    %c0_11 = arith.constant 0 : index
    %c0_12 = arith.constant 0 : index
    %13 = vector.load %arg6[%c0_11, %c0_12] : memref<32x128xf32, #tpu.memory_space<vmem>>, vector<32x128xf32>
    tpu.vector_store %arg6[%c0_11, %c0_12], %12 {strides = array<i32>} : memref<32x128xf32, #tpu.memory_space<vmem>>, vector<32x128xf32>,
    return
  }
  func.func @transform_0(%arg0: i32) -> (i32, i32) {
    %c0_i32 = arith.constant 0 : i32
    %c0_i32_0 = arith.constant 0 : i32
    return %arg0, %c0_i32 : i32, i32
  }
  func.func @transform_1(%arg0: i32) -> (i32, i32) {
    %c0_i32 = arith.constant 0 : i32
    %c0_i32_0 = arith.constant 0 : i32
    %c0_i32_1 = arith.constant 0 : i32
    return %c0_i32, %c0_i32_0 : i32, i32
  }
  func.func @transform_2(%arg0: i32) -> (i32, i32) {
    %c0_i32 = arith.constant 0 : i32
    %c0_i32_0 = arith.constant 0 : i32
    %c0_i32_1 = arith.constant 0 : i32
    return %c0_i32, %c0_i32_0 : i32, i32
  }
  func.func @transform_3(%arg0: i32) -> (i32, i32) {
    %c0_i32 = arith.constant 0 : i32
    %c0_i32_0 = arith.constant 0 : i32
    %c0_i32_1 = arith.constant 0 : i32
    return %c0_i32, %c0_i32_0 : i32, i32
  }
  func.func @transform_4(%arg0: i32) -> (i32, i32) {
    %c0_i32 = arith.constant 0 : i32
    %c0_i32_0 = arith.constant 0 : i32
    %c0_i32_1 = arith.constant 0 : i32
    return %c0_i32, %c0_i32_0 : i32, i32
  }
  func.func @transform_5(%arg0: i32) -> (i32, i32) {
    %c0_i32 = arith.constant 0 : i32
    %c0_i32_0 = arith.constant 0 : i32
    return %arg0, %c0_i32 : i32, i32
  }
}

</mosaic_0001>

<llo_original>
// kernel: tpu_custom_call.1
$region0: #{tpu_custom_call.1}
  #allocation0 [shape = 'u32[]', space=smem, size = 0x4, offset = 0x4, fixed_abs, tag = 'smem constant byte address 0x4 - core index']
  #allocation1 [shape = 'u32[72,128]{1,0:T(1,128)}', space=vmem, size = 0x9000, scoped, tag = 'internal scratch']
  %s0 = inlined_call_operand.hbm [shape: f32[32,784], index: 0, kind: input, shape index: {}]
  %s1 = inlined_call_operand.hbm [shape: f32[784,128], index: 1, kind: input, shape index: {}]
  %s2 = inlined_call_operand.vmem [shape: f32[1,128], index: 2, kind: input, shape index: {}]
  %s3 = inlined_call_operand.hbm [shape: f32[128,128], index: 3, kind: input, shape index: {}]
  %s4 = inlined_call_operand.vmem [shape: f32[1,128], index: 4, kind: input, shape index: {}]
  %s5 = inlined_call_operand.hbm [shape: f32[32,128], index: 5, kind: output, shape index: {}]
  %s6 = sld [smem:[#allocation0]]
  $region42: #{tpu_custom_call.1} parent=0
    _
  %s8 = ssub.s32 1, %s6
  %s9 = scalar_select 0, %s8, %s6
  $region1: #{tpu_custom_call.1} parent=0
    #allocation2 [shape = 'u8[114688]{0}', space=vmem, size = 0x1c000, scoped, tag = 'input window, operand 0, single buffered']
    #allocation3 [shape = 's32[1]{0}', space=sflag, size = 0x4, scoped, tag = 'scoped memory for tpu_custom_call.1']
    #allocation4 [shape = 's32[1]{0}', space=sflag, size = 0x4, scoped, tag = 'scoped memory for tpu_custom_call.1']
    #allocation5 [shape = 'u8[401408]{0}', space=vmem, size = 0x62000, scoped, tag = 'input window, operand 1, single buffered']
    #allocation6 [shape = 's32[1]{0}', space=sflag, size = 0x4, scoped, tag = 'scoped memory for tpu_custom_call.1']
    #allocation7 [shape = 'u8[65536]{0}', space=vmem, size = 0x10000, scoped, tag = 'input window, operand 3, single buffered']
    #allocation8 [shape = 'u8[16384]{0}', space=vmem, size = 0x4000, scoped, tag = 'output window, operand 0, single buffered']
    %10 = vsyncpa [#allocation3], 0
    %11 = vsyncpa [#allocation6], 0
    %12 = vsyncpa [#allocation4], 0
    // Predicated region
    $region2: #{tpu_custom_call.1} parent=1 // pred_check
      _
    $region3: #{tpu_custom_call.1} parent=1 // pred_check_branch
      %14 = sbr.rel (0) target = $region5
    $region4: #{tpu_custom_call.1} parent=1 // pred_region
      %16 = vsyncadd [#allocation3], 0
      %s17 = sshll.u32 %s0, 4
      %s18 = int_to_ptr.hbm [resolvable:$true] %s17
      %s19 = sshll.u32 [#allocation2], 4
      %s20 = int_to_ptr.vmem [resolvable:$true] %s19
      %25 = dma.hbm_to_vmem [thread:$0]  %s18, 3584, %s20, [#allocation3], 896, 896, 56
    $region5: #{tpu_custom_call.1} parent=1 // pred_fallthru
      _
    // Predicated region
    $region6: #{tpu_custom_call.1} parent=1 // pred_check
      _
    $region7: #{tpu_custom_call.1} parent=1 // pred_check_branch
      %27 = sbr.rel (0) target = $region9
    $region8: #{tpu_custom_call.1} parent=1 // pred_region
      %29 = vsyncadd [#allocation6], 0
      %s30 = sshll.u32 %s1, 4
      %s31 = int_to_ptr.hbm [resolvable:$true] %s30
      %s32 = sshll.u32 [#allocation5], 4
      %s33 = int_to_ptr.vmem [resolvable:$true] %s32
      %38 = dma.hbm_to_vmem [thread:$0]  %s31, 12544, %s33, [#allocation6], 128, 128, 8
    $region9: #{tpu_custom_call.1} parent=1 // pred_fallthru
      _
    // Predicated region
    $region10: #{tpu_custom_call.1} parent=1 // pred_check
      _
    $region11: #{tpu_custom_call.1} parent=1 // pred_check_branch
      %40 = sbr.rel (0) target = $region13
    $region12: #{tpu_custom_call.1} parent=1 // pred_region
      _
    $region13: #{tpu_custom_call.1} parent=1 // pred_fallthru
      _
    // Predicated region
    $region14: #{tpu_custom_call.1} parent=1 // pred_check
      _
    $region15: #{tpu_custom_call.1} parent=1 // pred_check_branch
      %42 = sbr.rel (0) target = $region17
    $region16: #{tpu_custom_call.1} parent=1 // pred_region
      %44 = vsyncadd [#allocation6], 0
      %s45 = sshll.u32 %s3, 4
      %s46 = int_to_ptr.hbm [resolvable:$true] %s45
      %s47 = sshll.u32 [#allocation7], 4
      %s48 = int_to_ptr.vmem [resolvable:$true] %s47
      %53 = dma.hbm_to_vmem [thread:$0]  %s46, 2048, %s48, [#allocation6], 128, 128, 8
    $region17: #{tpu_custom_call.1} parent=1 // pred_fallthru
      _
    // Predicated region
    $region18: #{tpu_custom_call.1} parent=1 // pred_check
      _
    $region19: #{tpu_custom_call.1} parent=1 // pred_check_branch
      %55 = sbr.rel (0) target = $region21
    $region20: #{tpu_custom_call.1} parent=1 // pred_region
      _
    $region21: #{tpu_custom_call.1} parent=1 // pred_fallthru
      _
    // Predicated region
    $region22: #{tpu_custom_call.1} parent=1 // pred_check
      _
    $region23: #{tpu_custom_call.1} parent=1 // pred_check_branch
      %57 = sbr.rel (0) target = $region25
    $region24: #{tpu_custom_call.1} parent=1 // pred_region
      %59 = dma.done [#allocation3], 3584
    $region25: #{tpu_custom_call.1} parent=1 // pred_fallthru
      _
    // Predicated region
    $region26: #{tpu_custom_call.1} parent=1 // pred_check
      _
    $region27: #{tpu_custom_call.1} parent=1 // pred_check_branch
      %61 = sbr.rel (0) target = $region29
    $region28: #{tpu_custom_call.1} parent=1 // pred_region
      %63 = dma.done [#allocation6], 12544
    $region29: #{tpu_custom_call.1} parent=1 // pred_fallthru
      _
    // Predicated region
    $region30: #{tpu_custom_call.1} parent=1 // pred_check
      _
    $region31: #{tpu_custom_call.1} parent=1 // pred_check_branch
      %65 = sbr.rel (0) target = $region33
    $region32: #{tpu_custom_call.1} parent=1 // pred_region
      %67 = dma.done [#allocation6], 2048
    $region33: #{tpu_custom_call.1} parent=1 // pred_fallthru
      _
    %v68 = vld [vmem:[#allocation2] sm:$0xff]
    %v69 = vld [vmem:[#allocation2 + $0x8] sm:$0xff]
    %v70 = vld [vmem:[#allocation2 + $0x10] sm:$0xff]
    %v71 = vld [vmem:[#allocation2 + $0x18] sm:$0xff]
    %v72 = vld [vmem:[#allocation2 + $0x20] sm:$0xff]
    %v73 = vld [vmem:[#allocation2 + $0x28] sm:$0xff]
    %v74 = vld [vmem:[#allocation2 + $0x30] sm:$0xff]
    %v75 = vld [vmem:[#allocation2 + $0x38] sm:$0xff]
    %v76 = vld [vmem:[#allocation2 + $0x40] sm:$0xff]
    %v77 = vld [vmem:[#allocation2 + $0x48] sm:$0xff]
    %v78 = vld [vmem:[#allocation2 + $0x50] sm:$0xff]
    %v79 = vld [vmem:[#allocation2 + $0x58] sm:$0xff]
    %v80 = vld [vmem:[#allocation2 + $0x60] sm:$0xff]
    %v81 = vld [vmem:[#allocation2 + $0x68] sm:$0xff]
    %v82 = vld [vmem:[#allocation2 + $0x70] sm:$0xff]
    %v83 = vld [vmem:[#allocation2 + $0x78] sm:$0xff]
    %v84 = vld [vmem:[#allocation2 + $0x80] sm:$0xff]
    %v85 = vld [vmem:[#allocation2 + $0x88] sm:$0xff]
    %v86 = vld [vmem:[#allocation2 + $0x90] sm:$0xff]
    %v87 = vld [vmem:[#allocation2 + $0x98] sm:$0xff]
    %v88 = vld [vmem:[#allocation2 + $0xa0] sm:$0xff]
    %v89 = vld [vmem:[#allocation2 + $0xa8] sm:$0xff]
    %v90 = vld [vmem:[#allocation2 + $0xb0] sm:$0xff]
    %v91 = vld [vmem:[#allocation2 + $0xb8] sm:$0xff]
    %v92 = vld [vmem:[#allocation2 + $0xc0] sm:$0xff]
    %v93 = vld [vmem:[#allocation2 + $0xc8] sm:$0xff]
    %v94 = vld [vmem:[#allocation2 + $0xd0] sm:$0xff]
    %v95 = vld [vmem:[#allocation2 + $0xd8] sm:$0xff]
    %v96 = vld [vmem:[#allocation5] sm:$0xff]
    %v97 = vld [vmem:[#allocation5 + $0x8] sm:$0xff]
    %v98 = vld [vmem:[#allocation5 + $0x10] sm:$0xff]
    %v99 = vld [vmem:[#allocation5 + $0x18] sm:$0xff]
    %v100 = vld [vmem:[#allocation5 + $0x20] sm:$0xff]
    %v101 = vld [vmem:[#allocation5 + $0x28] sm:$0xff]
    %v102 = vld [vmem:[#allocation5 + $0x30] sm:$0xff]
    %v103 = vld [vmem:[#allocation5 + $0x38] sm:$0xff]
    %v104 = vld [vmem:[#allocation5 + $0x40] sm:$0xff]
    %v105 = vld [vmem:[#allocation5 + $0x48] sm:$0xff]
    %v106 = vld [vmem:[#allocation5 + $0x50] sm:$0xff]
    %v107 = vld [vmem:[#allocation5 + $0x58] sm:$0xff]
    %v108 = vld [vmem:[#allocation5 + $0x60] sm:$0xff]
    %v109 = vld [vmem:[#allocation5 + $0x68] sm:$0xff]
    %v110 = vld [vmem:[#allocation5 + $0x70] sm:$0xff]
    %v111 = vld [vmem:[#allocation5 + $0x78] sm:$0xff]
    %v112 = vld [vmem:[#allocation5 + $0x80] sm:$0xff]
    %v113 = vld [vmem:[#allocation5 + $0x88] sm:$0xff]
    %v114 = vld [vmem:[#allocation5 + $0x90] sm:$0xff]
    %v115 = vld [vmem:[#allocation5 + $0x98] sm:$0xff]
    %v116 = vld [vmem:[#allocation5 + $0xa0] sm:$0xff]
    %v117 = vld [vmem:[#allocation5 + $0xa8] sm:$0xff]
    %v118 = vld [vmem:[#allocation5 + $0xb0] sm:$0xff]
    %v119 = vld [vmem:[#allocation5 + $0xb8] sm:$0xff]
    %v120 = vld [vmem:[#allocation5 + $0xc0] sm:$0xff]
    %v121 = vld [vmem:[#allocation5 + $0xc8] sm:$0xff]
    %v122 = vld [vmem:[#allocation5 + $0xd0] sm:$0xff]
    %v123 = vld [vmem:[#allocation5 + $0xd8] sm:$0xff]
    %v124 = vld [vmem:[#allocation5 + $0xe0] sm:$0xff]
    %v125 = vld [vmem:[#allocation5 + $0xe8] sm:$0xff]
    %v126 = vld [vmem:[#allocation5 + $0xf0] sm:$0xff]
    %v127 = vld [vmem:[#allocation5 + $0xf8] sm:$0xff]
    %v128 = vld [vmem:[#allocation5 + $0x100] sm:$0xff]
    %v129 = vld [vmem:[#allocation5 + $0x108] sm:$0xff]
    %v130 = vld [vmem:[#allocation5 + $0x110] sm:$0xff]
    %v131 = vld [vmem:[#allocation5 + $0x118] sm:$0xff]
    %v132 = vld [vmem:[#allocation5 + $0x120] sm:$0xff]
    %v133 = vld [vmem:[#allocation5 + $0x128] sm:$0xff]
    %v134 = vld [vmem:[#allocation5 + $0x130] sm:$0xff]
    %v135 = vld [vmem:[#allocation5 + $0x138] sm:$0xff]
    %v136 = vld [vmem:[#allocation5 + $0x140] sm:$0xff]
    %v137 = vld [vmem:[#allocation5 + $0x148] sm:$0xff]
    %v138 = vld [vmem:[#allocation5 + $0x150] sm:$0xff]
    %v139 = vld [vmem:[#allocation5 + $0x158] sm:$0xff]
    %v140 = vld [vmem:[#allocation5 + $0x160] sm:$0xff]
    %v141 = vld [vmem:[#allocation5 + $0x168] sm:$0xff]
    %v142 = vld [vmem:[#allocation5 + $0x170] sm:$0xff]
    %v143 = vld [vmem:[#allocation5 + $0x178] sm:$0xff]
    %v144 = vld [vmem:[#allocation5 + $0x180] sm:$0xff]
    %v145 = vld [vmem:[#allocation5 + $0x188] sm:$0xff]
    %v146 = vld [vmem:[#allocation5 + $0x190] sm:$0xff]
    %v147 = vld [vmem:[#allocation5 + $0x198] sm:$0xff]
    %v148 = vld [vmem:[#allocation5 + $0x1a0] sm:$0xff]
    %v149 = vld [vmem:[#allocation5 + $0x1a8] sm:$0xff]
    %v150 = vld [vmem:[#allocation5 + $0x1b0] sm:$0xff]
    %v151 = vld [vmem:[#allocation5 + $0x1b8] sm:$0xff]
    %v152 = vld [vmem:[#allocation5 + $0x1c0] sm:$0xff]
    %v153 = vld [vmem:[#allocation5 + $0x1c8] sm:$0xff]
    %v154 = vld [vmem:[#allocation5 + $0x1d0] sm:$0xff]
    %v155 = vld [vmem:[#allocation5 + $0x1d8] sm:$0xff]
    %v156 = vld [vmem:[#allocation5 + $0x1e0] sm:$0xff]
    %v157 = vld [vmem:[#allocation5 + $0x1e8] sm:$0xff]
    %v158 = vld [vmem:[#allocation5 + $0x1f0] sm:$0xff]
    %v159 = vld [vmem:[#allocation5 + $0x1f8] sm:$0xff]
    %v160 = vld [vmem:[#allocation5 + $0x200] sm:$0xff]
    %v161 = vld [vmem:[#allocation5 + $0x208] sm:$0xff]
    %v162 = vld [vmem:[#allocation5 + $0x210] sm:$0xff]
    %v163 = vld [vmem:[#allocation5 + $0x218] sm:$0xff]
    %v164 = vld [vmem:[#allocation5 + $0x220] sm:$0xff]
    %v165 = vld [vmem:[#allocation5 + $0x228] sm:$0xff]
    %v166 = vld [vmem:[#allocation5 + $0x230] sm:$0xff]
    %v167 = vld [vmem:[#allocation5 + $0x238] sm:$0xff]
    %v168 = vld [vmem:[#allocation5 + $0x240] sm:$0xff]
    %v169 = vld [vmem:[#allocation5 + $0x248] sm:$0xff]
    %v170 = vld [vmem:[#allocation5 + $0x250] sm:$0xff]
    %v171 = vld [vmem:[#allocation5 + $0x258] sm:$0xff]
    %v172 = vld [vmem:[#allocation5 + $0x260] sm:$0xff]
    %v173 = vld [vmem:[#allocation5 + $0x268] sm:$0xff]
    %v174 = vld [vmem:[#allocation5 + $0x270] sm:$0xff]
    %v175 = vld [vmem:[#allocation5 + $0x278] sm:$0xff]
    %v176 = vld [vmem:[#allocation5 + $0x280] sm:$0xff]
    %v177 = vld [vmem:[#allocation5 + $0x288] sm:$0xff]
    %v178 = vld [vmem:[#allocation5 + $0x290] sm:$0xff]
    %v179 = vld [vmem:[#allocation5 + $0x298] sm:$0xff]
    %v180 = vld [vmem:[#allocation5 + $0x2a0] sm:$0xff]
    %v181 = vld [vmem:[#allocation5 + $0x2a8] sm:$0xff]
    %v182 = vld [vmem:[#allocation5 + $0x2b0] sm:$0xff]
    %v183 = vld [vmem:[#allocation5 + $0x2b8] sm:$0xff]
    %v184 = vld [vmem:[#allocation5 + $0x2c0] sm:$0xff]
    %v185 = vld [vmem:[#allocation5 + $0x2c8] sm:$0xff]
    %v186 = vld [vmem:[#allocation5 + $0x2d0] sm:$0xff]
    %v187 = vld [vmem:[#allocation5 + $0x2d8] sm:$0xff]
    %v188 = vld [vmem:[#allocation5 + $0x2e0] sm:$0xff]
    %v189 = vld [vmem:[#allocation5 + $0x2e8] sm:$0xff]
    %v190 = vld [vmem:[#allocation5 + $0x2f0] sm:$0xff]
    %v191 = vld [vmem:[#allocation5 + $0x2f8] sm:$0xff]
    %v192 = vld [vmem:[#allocation5 + $0x300] sm:$0xff]
    %v193 = vld [vmem:[#allocation5 + $0x308] sm:$0xff]
    %v194 = vld [vmem:[%s2] sm:$0x1]
    %v196 = vperm.slane %v194, 0
    %vm198 = vcmask 130048
    %v200 = vsel %vm198, %v74, 0
    %v203 = vsel %vm198, %v81, 0
    %v206 = vsel %vm198, %v88, 0
    %v209 = vsel %vm198, %v95, 0
    %211 = vmatpush.msra.mxu0 %v111
    %212 = vmatpush.msra.mxu0 %v110
    %213 = vmatpush.msra.mxu0 %v109
    %214 = vmatpush.msra.mxu0 %v108
    %215 = vmatpush.msra.mxu0 %v107
    %216 = vmatpush.msra.mxu0 %v106
    %217 = vmatpush.msra.mxu0 %v105
    %218 = vmatpush.msra.mxu0 %v104
    %219 = vmatpush.msra.mxu0 %v103
    %220 = vmatpush.msra.mxu0 %v102
    %221 = vmatpush.msra.mxu0 %v101
    %222 = vmatpush.msra.mxu0 %v100
    %223 = vmatpush.msra.mxu0 %v99
    %224 = vmatpush.msra.mxu0 %v98
    %225 = vmatpush.msra.mxu0 %v97
    %226 = vmatpush.msra.mxu0 %v96
    %227 = vmatmul.f32.gmra.mxu0 %v68
    %v228 = vpop.f32.mrf.mxu0
    %v229 = vadd.f32 %v196, %v228
    %230 = vmatmul.f32.gmra.mxu0 %v75
    %v231 = vpop.f32.mrf.mxu0
    %v232 = vadd.f32 %v196, %v231
    %233 = vmatmul.f32.gmra.mxu0 %v82
    %v234 = vpop.f32.mrf.mxu0
    %v235 = vadd.f32 %v196, %v234
    %236 = vmatmul.f32.gmra.mxu0 %v89
    %v237 = vpop.f32.mrf.mxu0
    %v238 = vadd.f32 %v196, %v237
    %239 = vdwg.mxu0
    %240 = vmatpush.msra.mxu0 %v127
    %241 = vmatpush.msra.mxu0 %v126
    %242 = vmatpush.msra.mxu0 %v125
    %243 = vmatpush.msra.mxu0 %v124
    %244 = vmatpush.msra.mxu0 %v123
    %245 = vmatpush.msra.mxu0 %v122
    %246 = vmatpush.msra.mxu0 %v121
    %247 = vmatpush.msra.mxu0 %v120
    %248 = vmatpush.msra.mxu0 %v119
    %249 = vmatpush.msra.mxu0 %v118
    %250 = vmatpush.msra.mxu0 %v117
    %251 = vmatpush.msra.mxu0 %v116
    %252 = vmatpush.msra.mxu0 %v115
    %253 = vmatpush.msra.mxu0 %v114
    %254 = vmatpush.msra.mxu0 %v113
    %255 = vmatpush.msra.mxu0 %v112
    %256 = vmatmul.f32.gmra.mxu0 %v69
    %v257 = vpop.f32.mrf.mxu0
    %v258 = vadd.f32 %v229, %v257
    %259 = vmatmul.f32.gmra.mxu0 %v76
    %v260 = vpop.f32.mrf.mxu0
    %v261 = vadd.f32 %v232, %v260
    %262 = vmatmul.f32.gmra.mxu0 %v83
    %v263 = vpop.f32.mrf.mxu0
    %v264 = vadd.f32 %v235, %v263
    %265 = vmatmul.f32.gmra.mxu0 %v90
    %v266 = vpop.f32.mrf.mxu0
    %v267 = vadd.f32 %v238, %v266
    %268 = vdwg.mxu0
    %269 = vmatpush.msra.mxu0 %v143
    %270 = vmatpush.msra.mxu0 %v142
    %271 = vmatpush.msra.mxu0 %v141
    %272 = vmatpush.msra.mxu0 %v140
    %273 = vmatpush.msra.mxu0 %v139
    %274 = vmatpush.msra.mxu0 %v138
    %275 = vmatpush.msra.mxu0 %v137
    %276 = vmatpush.msra.mxu0 %v136
    %277 = vmatpush.msra.mxu0 %v135
    %278 = vmatpush.msra.mxu0 %v134
    %279 = vmatpush.msra.mxu0 %v133
    %280 = vmatpush.msra.mxu0 %v132
    %281 = vmatpush.msra.mxu0 %v131
    %282 = vmatpush.msra.mxu0 %v130
    %283 = vmatpush.msra.mxu0 %v129
    %284 = vmatpush.msra.mxu0 %v128
    %285 = vmatmul.f32.gmra.mxu0 %v70
    %v286 = vpop.f32.mrf.mxu0
    %v287 = vadd.f32 %v258, %v286
    %288 = vmatmul.f32.gmra.mxu0 %v77
    %v289 = vpop.f32.mrf.mxu0
    %v290 = vadd.f32 %v261, %v289
    %291 = vmatmul.f32.gmra.mxu0 %v84
    %v292 = vpop.f32.mrf.mxu0
    %v293 = vadd.f32 %v264, %v292
    %294 = vmatmul.f32.gmra.mxu0 %v91
    %v295 = vpop.f32.mrf.mxu0
    %v296 = vadd.f32 %v267, %v295
    %297 = vdwg.mxu0
    %298 = vmatpush.msra.mxu0 %v159
    %299 = vmatpush.msra.mxu0 %v158
    %300 = vmatpush.msra.mxu0 %v157
    %301 = vmatpush.msra.mxu0 %v156
    %302 = vmatpush.msra.mxu0 %v155
    %303 = vmatpush.msra.mxu0 %v154
    %304 = vmatpush.msra.mxu0 %v153
    %305 = vmatpush.msra.mxu0 %v152
    %306 = vmatpush.msra.mxu0 %v151
    %307 = vmatpush.msra.mxu0 %v150
    %308 = vmatpush.msra.mxu0 %v149
    %309 = vmatpush.msra.mxu0 %v148
    %310 = vmatpush.msra.mxu0 %v147
    %311 = vmatpush.msra.mxu0 %v146
    %312 = vmatpush.msra.mxu0 %v145
    %313 = vmatpush.msra.mxu0 %v144
    %314 = vmatmul.f32.gmra.mxu0 %v71
    %v315 = vpop.f32.mrf.mxu0
    %v316 = vadd.f32 %v287, %v315
    %317 = vmatmul.f32.gmra.mxu0 %v78
    %v318 = vpop.f32.mrf.mxu0
    %v319 = vadd.f32 %v290, %v318
    %320 = vmatmul.f32.gmra.mxu0 %v85
    %v321 = vpop.f32.mrf.mxu0
    %v322 = vadd.f32 %v293, %v321
    %323 = vmatmul.f32.gmra.mxu0 %v92
    %v324 = vpop.f32.mrf.mxu0
    %v325 = vadd.f32 %v296, %v324
    %326 = vdwg.mxu0
    %327 = vmatpush.msra.mxu0 %v175
    %328 = vmatpush.msra.mxu0 %v174
    %329 = vmatpush.msra.mxu0 %v173
    %330 = vmatpush.msra.mxu0 %v172
    %331 = vmatpush.msra.mxu0 %v171
    %332 = vmatpush.msra.mxu0 %v170
    %333 = vmatpush.msra.mxu0 %v169
    %334 = vmatpush.msra.mxu0 %v168
    %335 = vmatpush.msra.mxu0 %v167
    %336 = vmatpush.msra.mxu0 %v166
    %337 = vmatpush.msra.mxu0 %v165
    %338 = vmatpush.msra.mxu0 %v164
    %339 = vmatpush.msra.mxu0 %v163
    %340 = vmatpush.msra.mxu0 %v162
    %341 = vmatpush.msra.mxu0 %v161
    %342 = vmatpush.msra.mxu0 %v160
    %343 = vmatmul.f32.gmra.mxu0 %v72
    %v344 = vpop.f32.mrf.mxu0
    %v345 = vadd.f32 %v316, %v344
    %346 = vmatmul.f32.gmra.mxu0 %v79
    %v347 = vpop.f32.mrf.mxu0
    %v348 = vadd.f32 %v319, %v347
    %349 = vmatmul.f32.gmra.mxu0 %v86
    %v350 = vpop.f32.mrf.mxu0
    %v351 = vadd.f32 %v322, %v350
    %352 = vmatmul.f32.gmra.mxu0 %v93
    %v353 = vpop.f32.mrf.mxu0
    %v354 = vadd.f32 %v325, %v353
    %355 = vdwg.mxu0
    %356 = vmatpush.msra.mxu0 %v191
    %357 = vmatpush.msra.mxu0 %v190
    %358 = vmatpush.msra.mxu0 %v189
    %359 = vmatpush.msra.mxu0 %v188
    %360 = vmatpush.msra.mxu0 %v187
    %361 = vmatpush.msra.mxu0 %v186
    %362 = vmatpush.msra.mxu0 %v185
    %363 = vmatpush.msra.mxu0 %v184
    %364 = vmatpush.msra.mxu0 %v183
    %365 = vmatpush.msra.mxu0 %v182
    %366 = vmatpush.msra.mxu0 %v181
    %367 = vmatpush.msra.mxu0 %v180
    %368 = vmatpush.msra.mxu0 %v179
    %369 = vmatpush.msra.mxu0 %v178
    %370 = vmatpush.msra.mxu0 %v177
    %371 = vmatpush.msra.mxu0 %v176
    %372 = vmatmul.f32.gmra.mxu0 %v73
    %v373 = vpop.f32.mrf.mxu0
    %v374 = vadd.f32 %v345, %v373
    %375 = vmatmul.f32.gmra.mxu0 %v80
    %v376 = vpop.f32.mrf.mxu0
    %v377 = vadd.f32 %v348, %v376
    %378 = vmatmul.f32.gmra.mxu0 %v87
    %v379 = vpop.f32.mrf.mxu0
    %v380 = vadd.f32 %v351, %v379
    %381 = vmatmul.f32.gmra.mxu0 %v94
    %v382 = vpop.f32.mrf.mxu0
    %v383 = vadd.f32 %v354, %v382
    %384 = vdwg.mxu0
    %385 = vmatpush.msra.mxu0 0.0
    %386 = vmatpush.msra.mxu0 0.0
    %387 = vmatpush.msra.mxu0 0.0
    %388 = vmatpush.msra.mxu0 0.0
    %389 = vmatpush.msra.mxu0 0.0
    %390 = vmatpush.msra.mxu0 0.0
    %391 = vmatpush.msra.mxu0 0.0
    %392 = vmatpush.msra.mxu0 0.0
    %393 = vmatpush.msra.mxu0 0.0
    %394 = vmatpush.msra.mxu0 0.0
    %395 = vmatpush.msra.mxu0 0.0
    %396 = vmatpush.msra.mxu0 0.0
    %397 = vmatpush.msra.mxu0 0.0
    %398 = vmatpush.msra.mxu0 0.0
    %399 = vmatpush.msra.mxu0 %v193
    %400 = vmatpush.msra.mxu0 %v192
    %401 = vmatmul.f32.gmra.mxu0 %v200
    %v402 = vpop.f32.mrf.mxu0
    %v403 = vadd.f32 %v374, %v402
    %404 = vmatmul.f32.gmra.mxu0 %v203
    %v405 = vpop.f32.mrf.mxu0
    %v406 = vadd.f32 %v377, %v405
    %407 = vmatmul.f32.gmra.mxu0 %v206
    %v408 = vpop.f32.mrf.mxu0
    %v409 = vadd.f32 %v380, %v408
    %410 = vmatmul.f32.gmra.mxu0 %v209
    %v411 = vpop.f32.mrf.mxu0
    %v412 = vadd.f32 %v383, %v411
    %413 = vdwg.mxu0
    %v414 = vmax.f32 %v403, 0.0
    %v415 = vmax.f32 %v406, 0.0
    %v416 = vmax.f32 %v409, 0.0
    %v417 = vmax.f32 %v412, 0.0
    %v418 = vld [vmem:[#allocation7] sm:$0xff]
    %v419 = vld [vmem:[#allocation7 + $0x8] sm:$0xff]
    %v420 = vld [vmem:[#allocation7 + $0x10] sm:$0xff]
    %v421 = vld [vmem:[#allocation7 + $0x18] sm:$0xff]
    %v422 = vld [vmem:[#allocation7 + $0x20] sm:$0xff]
    %v423 = vld [vmem:[#allocation7 + $0x28] sm:$0xff]
    %v424 = vld [vmem:[#allocation7 + $0x30] sm:$0xff]
    %v425 = vld [vmem:[#allocation7 + $0x38] sm:$0xff]
    %v426 = vld [vmem:[#allocation7 + $0x40] sm:$0xff]
    %v427 = vld [vmem:[#allocation7 + $0x48] sm:$0xff]
    %v428 = vld [vmem:[#allocation7 + $0x50] sm:$0xff]
    %v429 = vld [vmem:[#allocation7 + $0x58] sm:$0xff]
    %v430 = vld [vmem:[#allocation7 + $0x60] sm:$0xff]
    %v431 = vld [vmem:[#allocation7 + $0x68] sm:$0xff]
    %v432 = vld [vmem:[#allocation7 + $0x70] sm:$0xff]
    %v433 = vld [vmem:[#allocation7 + $0x78] sm:$0xff]
    %v434 = vld [vmem:[%s4] sm:$0x1]
    %v436 = vperm.slane %v434, 0
    %438 = vmatpush.msra.mxu0 %v433
    %439 = vmatpush.msra.mxu0 %v432
    %440 = vmatpush.msra.mxu0 %v431
    %441 = vmatpush.msra.mxu0 %v430
    %442 = vmatpush.msra.mxu0 %v429
    %443 = vmatpush.msra.mxu0 %v428
    %444 = vmatpush.msra.mxu0 %v427
    %445 = vmatpush.msra.mxu0 %v426
    %446 = vmatpush.msra.mxu0 %v425
    %447 = vmatpush.msra.mxu0 %v424
    %448 = vmatpush.msra.mxu0 %v423
    %449 = vmatpush.msra.mxu0 %v422
    %450 = vmatpush.msra.mxu0 %v421
    %451 = vmatpush.msra.mxu0 %v420
    %452 = vmatpush.msra.mxu0 %v419
    %453 = vmatpush.msra.mxu0 %v418
    %454 = vmatmul.f32.gmra.mxu0 %v414
    %v455 = vpop.f32.mrf.mxu0
    %v456 = vadd.f32 %v436, %v455
    %457 = vmatmul.f32.gmra.mxu0 %v415
    %v458 = vpop.f32.mrf.mxu0
    %v459 = vadd.f32 %v436, %v458
    %460 = vmatmul.f32.gmra.mxu0 %v416
    %v461 = vpop.f32.mrf.mxu0
    %v462 = vadd.f32 %v436, %v461
    %463 = vmatmul.f32.gmra.mxu0 %v417
    %v464 = vpop.f32.mrf.mxu0
    %v465 = vadd.f32 %v436, %v464
    %466 = vdwg.mxu0
    %467 = vst [vmem:[#allocation8] sm:$0xff] %v456
    %468 = vst [vmem:[#allocation8 + $0x8] sm:$0xff] %v459
    %469 = vst [vmem:[#allocation8 + $0x10] sm:$0xff] %v462
    %470 = vst [vmem:[#allocation8 + $0x18] sm:$0xff] %v465
    // Predicated region
    $region34: #{tpu_custom_call.1} parent=1 // pred_check
      _
    $region35: #{tpu_custom_call.1} parent=1 // pred_check_branch
      %472 = sbr.rel (0) target = $region37
    $region36: #{tpu_custom_call.1} parent=1 // pred_region
      %474 = vsyncadd [#allocation4], 0
      %s475 = sshll.u32 [#allocation8], 4
      %s476 = int_to_ptr.vmem [resolvable:$true] %s475
      %s477 = sshll.u32 %s5, 4
      %s478 = int_to_ptr.hbm [resolvable:$true] %s477
      %483 = dma.vmem_to_hbm [thread:$0]  %s476, 512, %s478, [#allocation4], 128, 128, 8
    $region37: #{tpu_custom_call.1} parent=1 // pred_fallthru
      _
    // Predicated region
    $region38: #{tpu_custom_call.1} parent=1 // pred_check
      _
    $region39: #{tpu_custom_call.1} parent=1 // pred_check_branch
      %485 = sbr.rel (0) target = $region41
    $region40: #{tpu_custom_call.1} parent=1 // pred_region
      %487 = dma.done [#allocation4], 512
    $region41: #{tpu_custom_call.1} parent=1 // pred_fallthru
      _
    %488 = vsyncpa [#allocation3], 1
    %489 = vsyncpa [#allocation6], 1
    %490 = vsyncpa [#allocation4], 1

</llo_original>
